<compile_context>
chip_gen: v6e
topology: v6e:2x2x1
jax: 0.10.0
libtpu: 0.0.40
codegen_flags: <defaults>
</compile_context>

<pallas_src>
import functools

import jax
import jax.numpy as jnp
from jax.experimental import pallas as pl
from jax.experimental.pallas import tpu as pltpu

HIDDEN = 128
LANE = 128


def _round_up(x, m):
    return ((x + m - 1) // m) * m


def mlp_kernel(x_ref, w1_ref, b1_ref, w2_ref, b2_ref, o_ref, *, d_out):
    # x: (TB, D_in_p) f32, w1: (D_in_p, H) f32, b1: (1, H) f32,
    # w2: (H, D_out_p) f32, b2: (1, D_out_p) f32.  Padded cols of w2/b2 are zero.
    x = x_ref[...]

    # layer1 + bias + ReLU (f32 MXU matmul, f32 accumulate)
    h = jnp.dot(x, w1_ref[...], preferred_element_type=jnp.float32) + b1_ref[...]
    h = jnp.maximum(h, 0.0)

    # layer2
    logits = jnp.dot(h, w2_ref[...], preferred_element_type=jnp.float32) + b2_ref[...]

    # Numerically stable softmax over the *real* d_out class columns.
    # Padded columns are explicitly excluded from both the max and the sum.
    col = jax.lax.broadcasted_iota(jnp.int32, logits.shape, 1)
    valid = col < d_out
    neg = jnp.float32(-1e30)                      # finite "-inf" (no inf arithmetic)
    logits = jnp.where(valid, logits, neg)
    m = jnp.max(logits, axis=-1, keepdims=True)
    e = jnp.where(valid, jnp.exp(logits - m), 0.0)
    denom = jnp.sum(e, axis=-1, keepdims=True)    # >= 1 (max column contributes 1)
    o_ref[...] = (e / denom).astype(o_ref.dtype)  # exact normalization


@functools.partial(jax.jit, static_argnames=("tb",))
def mlp_forward(x, w1, b1, w2, b2, *, tb=256):
    """x: (B, D_in) f32; w1: (D_in, H); b1: (H,); w2: (H, D_out); b2: (D_out,)."""
    B, D_in = x.shape
    H = w1.shape[1]
    D_out = w2.shape[1]

    # lane-dense padding of the feature / class axes
    D_in_p = _round_up(max(D_in, LANE), LANE)
    D_out_p = _round_up(max(D_out, LANE), LANE)

    # batch tile: multiple of 8 (f32 sublane tile), capped at `tb`
    B_min = _round_up(B, 8)
    TB = min(_round_up(tb, 8), B_min)
    B_p = _round_up(B_min, TB)

    f32 = jnp.float32
    x_p = jnp.zeros((B_p, D_in_p), f32).at[:B, :D_in].set(x.astype(f32))
    w1_p = jnp.zeros((D_in_p, H), f32).at[:D_in, :].set(w1.astype(f32))
    b1_p = jnp.reshape(b1.astype(f32), (1, H))
    w2_p = jnp.zeros((H, D_out_p), f32).at[:, :D_out].set(w2.astype(f32))
    b2_p = jnp.zeros((1, D_out_p), f32).at[0, :D_out].set(
        jnp.reshape(b2.astype(f32), (D_out,)))

    kernel = functools.partial(mlp_kernel, d_out=D_out)

    out_p = pl.pallas_call(
        kernel,
        out_shape=jax.ShapeDtypeStruct((B_p, D_out_p), f32),
        grid_spec=pl.GridSpec(
            grid=(B_p // TB,),
            in_specs=[
                pl.BlockSpec((TB, D_in_p), lambda i: (i, 0)),   # x: per batch tile
                pl.BlockSpec((D_in_p, H), lambda i: (0, 0)),    # w1: resident
                pl.BlockSpec((1, H), lambda i: (0, 0)),         # b1: resident
                pl.BlockSpec((H, D_out_p), lambda i: (0, 0)),   # w2: resident
                pl.BlockSpec((1, D_out_p), lambda i: (0, 0)),   # b2: resident
            ],
            out_specs=pl.BlockSpec((TB, D_out_p), lambda i: (i, 0)),
        ),
        compiler_params=pltpu.CompilerParams(
            dimension_semantics=("parallel",),      # batch tiles are independent
            vmem_limit_bytes=32 * 1024 * 1024,
        ),
    )(x_p, w1_p, b1_p, w2_p, b2_p)

    return out_p[:B, :D_out]


def init_params(key, input_size, output_size):
    # Mirrors nn.Linear's U(-1/sqrt(fan_in), 1/sqrt(fan_in)) init; weights stored
    # pre-transposed as (in, out).
    k1, k2, k3, k4 = jax.random.split(key, 4)
    lim1 = 1.0 / jnp.sqrt(input_size)
    lim2 = 1.0 / jnp.sqrt(HIDDEN)
    w1 = jax.random.uniform(k1, (input_size, HIDDEN), jnp.float32, -lim1, lim1)
    b1 = jax.random.uniform(k2, (HIDDEN,), jnp.float32, -lim1, lim1)
    w2 = jax.random.uniform(k3, (HIDDEN, output_size), jnp.float32, -lim2, lim2)
    b2 = jax.random.uniform(k4, (output_size,), jnp.float32, -lim2, lim2)
    return w1, b1, w2, b2


if __name__ == "__main__":
    key = jax.random.PRNGKey(0)
    kx, kp = jax.random.split(key)

    batch = 48           # exercises multiple batch tiles with tb=16 below
    input_size = 32
    output_size = 16

    x = jax.random.normal(kx, (batch, input_size), jnp.float32)
    w1, b1, w2, b2 = init_params(kp, input_size, output_size)

    out = mlp_forward(x, w1, b1, w2, b2, tb=16)
    out = jax.block_until_ready(out)
    assert out.shape == (batch, output_size)

    # softmax rows must sum to 1 (exact normalization in-kernel)
    assert jnp.allclose(jnp.sum(out, axis=1), 1.0, atol=1e-4), float(
        jnp.max(jnp.abs(jnp.sum(out, axis=1) - 1.0)))

    # full-f32 reference matching PyTorch semantics
    ref = jax.nn.softmax(jnp.maximum(x @ w1 + b1, 0.0) @ w2 + b2, axis=1)
    assert jnp.allclose(out, ref, atol=1e-4), float(jnp.max(jnp.abs(out - ref)))

    print("KERNEL_OK")
</pallas_src>

<mosaic_0001>
module attributes {stable_mosaic.version = 11 : i64} {
  func.func @mlp_kernel(%arg0: i32, %arg1: memref<16x128xf32, #tpu.memory_space<vmem>>, %arg2: memref<128x128xf32, #tpu.memory_space<vmem>>, %arg3: memref<1x128xf32, #tpu.memory_space<vmem>>, %arg4: memref<128x128xf32, #tpu.memory_space<vmem>>, %arg5: memref<1x128xf32, #tpu.memory_space<vmem>>, %arg6: memref<16x128xf32, #tpu.memory_space<vmem>>) attributes {dimension_semantics = [#tpu.dimension_semantics<parallel>], iteration_bounds = array<i64: 3>, scalar_prefetch = 0 : i64, scratch_operands = 0 : i64, tpu.core_type = #tpu.core_type<tc>, window_params = [{transform_indices = @transform_0, window_bounds = array<i64: 16, 128>}, {pipeline_mode = #tpu.pipeline_mode<synchronous>, transform_indices = @transform_1, window_bounds = array<i64: 128, 128>}, {pipeline_mode = #tpu.pipeline_mode<synchronous>, transform_indices = @transform_2, window_bounds = array<i64: 1, 128>}, {pipeline_mode = #tpu.pipeline_mode<synchronous>, transform_indices = @transform_3, window_bounds = array<i64: 128, 128>}, {pipeline_mode = #tpu.pipeline_mode<synchronous>, transform_indices = @transform_4, window_bounds = array<i64: 1, 128>}, {transform_indices = @transform_5, window_bounds = array<i64: 16, 128>}]} {
    %c0 = arith.constant 0 : index
    %c0_0 = arith.constant 0 : index
    %0 = vector.load %arg1[%c0, %c0_0] : memref<16x128xf32, #tpu.memory_space<vmem>>, vector<16x128xf32>
    %c0_1 = arith.constant 0 : index
    %c0_2 = arith.constant 0 : index
    %1 = vector.load %arg2[%c0_1, %c0_2] : memref<128x128xf32, #tpu.memory_space<vmem>>, vector<128x128xf32>
    %cst = arith.constant dense<0.000000e+00> : vector<16x128xf32>
    %2 = tpu.matmul %0, %1, %cst {dimension_numbers = #tpu.dot_dimension_numbers<[1], [0], [0], [1], [0, 0, 1, 1], [], []>} : vector<16x128xf32>, vector<128x128xf32>, vector<16x128xf32> -> vector<16x128xf32>
    %c0_3 = arith.constant 0 : index
    %c0_4 = arith.constant 0 : index
    %3 = vector.load %arg3[%c0_3, %c0_4] : memref<1x128xf32, #tpu.memory_space<vmem>>, vector<1x128xf32>
    %4 = vector.broadcast %3 : vector<1x128xf32> to vector<16x128xf32>
    %5 = arith.addf %2, %4 : vector<16x128xf32>
    %cst_5 = arith.constant 0.000000e+00 : f32
    %6 = vector.broadcast %cst_5 : f32 to vector<16x128xf32>
    %7 = arith.maximumf %5, %6 : vector<16x128xf32>
    %c0_6 = arith.constant 0 : index
    %c0_7 = arith.constant 0 : index
    %8 = vector.load %arg4[%c0_6, %c0_7] : memref<128x128xf32, #tpu.memory_space<vmem>>, vector<128x128xf32>
    %cst_8 = arith.constant dense<0.000000e+00> : vector<16x128xf32>
    %9 = tpu.matmul %7, %8, %cst_8 {dimension_numbers = #tpu.dot_dimension_numbers<[1], [0], [0], [1], [0, 0, 1, 1], [], []>} : vector<16x128xf32>, vector<128x128xf32>, vector<16x128xf32> -> vector<16x128xf32>
    %c0_9 = arith.constant 0 : index
    %c0_10 = arith.constant 0 : index
    %10 = vector.load %arg5[%c0_9, %c0_10] : memref<1x128xf32, #tpu.memory_space<vmem>>, vector<1x128xf32>
    %11 = vector.broadcast %10 : vector<1x128xf32> to vector<16x128xf32>
    %12 = arith.addf %9, %11 : vector<16x128xf32>
    %13 = tpu.iota {dimensions = array<i32: 1>} : vector<16x128xi32>
    %c16_i32 = arith.constant 16 : i32
    %14 = vector.broadcast %c16_i32 : i32 to vector<16x128xi32>
    %15 = arith.cmpi slt, %13, %14 : vector<16x128xi32>
    %cst_11 = arith.constant -1.000000e+30 : f32
    %16 = vector.broadcast %cst_11 : f32 to vector<16x128xf32>
    %17 = arith.select %15, %12, %16 : vector<16x128xi1>, vector<16x128xf32>
    %cst_12 = arith.constant dense<0xFF800000> : vector<16xf32>
    %18 = vector.multi_reduction <maximumf>, %17, %cst_12 [1] : vector<16x128xf32> to vector<16xf32>
    %19 = vector.shape_cast %18 : vector<16xf32> to vector<16x1xf32>
    %20 = vector.broadcast %19 : vector<16x1xf32> to vector<16x128xf32>
    %21 = arith.subf %17, %20 : vector<16x128xf32>
    %22 = math.exp %21 : vector<16x128xf32>
    %cst_13 = arith.constant 0.000000e+00 : f32
    %23 = vector.broadcast %cst_13 : f32 to vector<16x128xf32>
    %24 = arith.select %15, %22, %23 : vector<16x128xi1>, vector<16x128xf32>
    %cst_14 = arith.constant dense<0.000000e+00> : vector<16xf32>
    %25 = vector.multi_reduction <add>, %24, %cst_14 [1] : vector<16x128xf32> to vector<16xf32>
    %26 = vector.shape_cast %25 : vector<16xf32> to vector<16x1xf32>
    %27 = vector.broadcast %26 : vector<16x1xf32> to vector<16x128xf32>
    %28 = arith.divf %24, %27 : vector<16x128xf32>
    %c0_15 = arith.constant 0 : index
    %c0_16 = arith.constant 0 : index
    %29 = vector.load %arg6[%c0_15, %c0_16] : memref<16x128xf32, #tpu.memory_space<vmem>>, vector<16x128xf32>
    tpu.vector_store %arg6[%c0_15, %c0_16], %28 {strides = array<i32>} : memref<16x128xf32, #tpu.memory_space<vmem>>, vector<16x128xf32>,
    return
  }
  func.func @transform_0(%arg0: i32) -> (i32, i32) {
    %c0_i32 = arith.constant 0 : i32
    %c0_i32_0 = arith.constant 0 : i32
    return %arg0, %c0_i32 : i32, i32
  }
  func.func @transform_1(%arg0: i32) -> (i32, i32) {
    %c0_i32 = arith.constant 0 : i32
    %c0_i32_0 = arith.constant 0 : i32
    %c0_i32_1 = arith.constant 0 : i32
    return %c0_i32, %c0_i32_0 : i32, i32
  }
  func.func @transform_2(%arg0: i32) -> (i32, i32) {
    %c0_i32 = arith.constant 0 : i32
    %c0_i32_0 = arith.constant 0 : i32
    %c0_i32_1 = arith.constant 0 : i32
    return %c0_i32, %c0_i32_0 : i32, i32
  }
  func.func @transform_3(%arg0: i32) -> (i32, i32) {
    %c0_i32 = arith.constant 0 : i32
    %c0_i32_0 = arith.constant 0 : i32
    %c0_i32_1 = arith.constant 0 : i32
    return %c0_i32, %c0_i32_0 : i32, i32
  }
  func.func @transform_4(%arg0: i32) -> (i32, i32) {
    %c0_i32 = arith.constant 0 : i32
    %c0_i32_0 = arith.constant 0 : i32
    %c0_i32_1 = arith.constant 0 : i32
    return %c0_i32, %c0_i32_0 : i32, i32
  }
  func.func @transform_5(%arg0: i32) -> (i32, i32) {
    %c0_i32 = arith.constant 0 : i32
    %c0_i32_0 = arith.constant 0 : i32
    return %arg0, %c0_i32 : i32, i32
  }
}

</mosaic_0001>

<llo_original>
// kernel: mlp_forward.1
$region0: #{mlp_forward.1}
  #allocation0 [shape = 'u32[]', space=smem, size = 0x4, offset = 0x4, fixed_abs, tag = 'smem constant byte address 0x4 - core index']
  #allocation1 [shape = 'u32[144,128]{1,0:T(1,128)}', space=vmem, size = 0x12000, scoped, tag = 'internal scratch']
  %s0 = inlined_call_operand.vmem [shape: f32[48,128], index: 0, kind: input, shape index: {}]
  %s1 = inlined_call_operand.vmem [shape: f32[128,128], index: 1, kind: input, shape index: {}]
  %s2 = inlined_call_operand.vmem [shape: f32[1,128], index: 2, kind: input, shape index: {}]
  %s3 = inlined_call_operand.vmem [shape: f32[128,128], index: 3, kind: input, shape index: {}]
  %s4 = inlined_call_operand.vmem [shape: f32[1,128], index: 4, kind: input, shape index: {}]
  %s5 = inlined_call_operand.vmem [shape: f32[48,128], index: 5, kind: output, shape index: {}]
  %s6 = sld [smem:[#allocation0]]
  $region53: #{mlp_forward.1} parent=0
    _
  %s8 = ssub.s32 1, %s6
  %s9 = scalar_select 0, %s8, %s6
  loop: start=0, step=1, limit=5
  $region2: #{mlp_forward.1} parent=0 // loop_pre_header
    _
  $region3: #{mlp_forward.1} parent=0 // loop_header
    %s11 = sphi 0, %s15
    %p12 = scmp.ge.s32.totalorder %s11, 5
    %s21 = sphi 0, %s23
    %s24 = sphi 0, %s21
    %s25 = sphi 0, %s24
    %s41 = sphi 0, %s25
    %s45 = sphi 0, %s45
    %s47 = sphi 0, %s45
    %s48 = sphi 0, %s47
    %s62 = sphi 0, %s48
    %s66 = sphi 0, %s66
    %s68 = sphi 0, %s66
    %s69 = sphi 0, %s68
    %s83 = sphi 0, %s69
    %s87 = sphi 0, %s87
    %s89 = sphi 0, %s87
    %s90 = sphi 0, %s89
    %s104 = sphi 0, %s90
    %s108 = sphi 0, %s108
    %s110 = sphi 0, %s108
    %s111 = sphi 0, %s110
    %s125 = sphi 0, %s111
    %s131 = sphi 0, %s133
    %s134 = sphi 0, %s131
    %s135 = sphi 0, %s134
    %s151 = sphi 0, %s135
  $region4: #{mlp_forward.1} parent=0 // loop_header_branch
    %14 = sbr.rel (%p12) target = $region8
  $region5: #{mlp_forward.1} parent=0 // loop_body
    %s16 = ssub.s32 %s11, 1
    %s17 = ssub.s32 %s11, 2
    %s18 = sadd.s32 %s11, 1
    %s19 = ssub.s32 %s11, %s18
    %p20 = scmp.eq.s32.totalorder %s19, 0
    %s22 = sadd.s32 %s21, 1
    %s23 = scalar_select %p20, %s21, %s22
    %p26 = pneg %p20
    %p27 = scmp.eq.s32.totalorder %s11, 2
    %p28 = por %p26, %p27
    %p29 = scmp.ne.s32.totalorder %s21, %s24
    %p30 = scmp.eq.s32.totalorder %s11, 0
    %p31 = por %p29, %p30
    %p32 = scmp.ne.s32.totalorder %s21, %s24
    %p33 = scmp.eq.s32.totalorder %s16, 2
    %p34 = por %p32, %p33
    %p35 = scmp.ne.s32.totalorder %s24, %s25
    %p36 = scmp.eq.s32.totalorder %s16, 0
    %p37 = por %p35, %p36
    %p38 = scmp.ne.s32.totalorder %s24, %s25
    %p39 = scmp.eq.s32.totalorder %s17, 2
    %p40 = por %p38, %p39
    %p42 = scmp.ne.s32.totalorder %s25, %s41
    %p43 = scmp.eq.s32.totalorder %s17, 0
    %p44 = por %p42, %p43
    %s46 = sadd.s32 %s45, 1
    %p49 = scmp.eq.s32.totalorder %s11, 2
    %p50 = scmp.ne.s32.totalorder %s45, %s47
    %p51 = scmp.eq.s32.totalorder %s11, 0
    %p52 = por %p50, %p51
    %p53 = scmp.ne.s32.totalorder %s45, %s47
    %p54 = scmp.eq.s32.totalorder %s16, 2
    %p55 = por %p53, %p54
    %p56 = scmp.ne.s32.totalorder %s47, %s48
    %p57 = scmp.eq.s32.totalorder %s16, 0
    %p58 = por %p56, %p57
    %p59 = scmp.ne.s32.totalorder %s47, %s48
    %p60 = scmp.eq.s32.totalorder %s17, 2
    %p61 = por %p59, %p60
    %p63 = scmp.ne.s32.totalorder %s48, %s62
    %p64 = scmp.eq.s32.totalorder %s17, 0
    %p65 = por %p63, %p64
    %s67 = sadd.s32 %s66, 1
    %p70 = scmp.eq.s32.totalorder %s11, 2
    %p71 = scmp.ne.s32.totalorder %s66, %s68
    %p72 = scmp.eq.s32.totalorder %s11, 0
    %p73 = por %p71, %p72
    %p74 = scmp.ne.s32.totalorder %s66, %s68
    %p75 = scmp.eq.s32.totalorder %s16, 2
    %p76 = por %p74, %p75
    %p77 = scmp.ne.s32.totalorder %s68, %s69
    %p78 = scmp.eq.s32.totalorder %s16, 0
    %p79 = por %p77, %p78
    %p80 = scmp.ne.s32.totalorder %s68, %s69
    %p81 = scmp.eq.s32.totalorder %s17, 2
    %p82 = por %p80, %p81
    %p84 = scmp.ne.s32.totalorder %s69, %s83
    %p85 = scmp.eq.s32.totalorder %s17, 0
    %p86 = por %p84, %p85
    %s88 = sadd.s32 %s87, 1
    %p91 = scmp.eq.s32.totalorder %s11, 2
    %p92 = scmp.ne.s32.totalorder %s87, %s89
    %p93 = scmp.eq.s32.totalorder %s11, 0
    %p94 = por %p92, %p93
    %p95 = scmp.ne.s32.totalorder %s87, %s89
    %p96 = scmp.eq.s32.totalorder %s16, 2
    %p97 = por %p95, %p96
    %p98 = scmp.ne.s32.totalorder %s89, %s90
    %p99 = scmp.eq.s32.totalorder %s16, 0
    %p100 = por %p98, %p99
    %p101 = scmp.ne.s32.totalorder %s89, %s90
    %p102 = scmp.eq.s32.totalorder %s17, 2
    %p103 = por %p101, %p102
    %p105 = scmp.ne.s32.totalorder %s90, %s104
    %p106 = scmp.eq.s32.totalorder %s17, 0
    %p107 = por %p105, %p106
    %s109 = sadd.s32 %s108, 1
    %p112 = scmp.eq.s32.totalorder %s11, 2
    %p113 = scmp.ne.s32.totalorder %s108, %s110
    %p114 = scmp.eq.s32.totalorder %s11, 0
    %p115 = por %p113, %p114
    %p116 = scmp.ne.s32.totalorder %s108, %s110
    %p117 = scmp.eq.s32.totalorder %s16, 2
    %p118 = por %p116, %p117
    %p119 = scmp.ne.s32.totalorder %s110, %s111
    %p120 = scmp.eq.s32.totalorder %s16, 0
    %p121 = por %p119, %p120
    %p122 = scmp.ne.s32.totalorder %s110, %s111
    %p123 = scmp.eq.s32.totalorder %s17, 2
    %p124 = por %p122, %p123
    %p126 = scmp.ne.s32.totalorder %s111, %s125
    %p127 = scmp.eq.s32.totalorder %s17, 0
    %p128 = por %p126, %p127
    %s129 = ssub.s32 %s11, %s18
    %p130 = scmp.eq.s32.totalorder %s129, 0
    %s132 = sadd.s32 %s131, 1
    %s133 = scalar_select %p130, %s131, %s132
    %p136 = pneg %p130
    %p137 = scmp.eq.s32.totalorder %s11, 2
    %p138 = por %p136, %p137
    %p139 = scmp.ne.s32.totalorder %s131, %s134
    %p140 = scmp.eq.s32.totalorder %s11, 0
    %p141 = por %p139, %p140
    %p142 = scmp.ne.s32.totalorder %s131, %s134
    %p143 = scmp.eq.s32.totalorder %s16, 2
    %p144 = por %p142, %p143
    %p145 = scmp.ne.s32.totalorder %s134, %s135
    %p146 = scmp.eq.s32.totalorder %s16, 0
    %p147 = por %p145, %p146
    %p148 = scmp.ne.s32.totalorder %s134, %s135
    %p149 = scmp.eq.s32.totalorder %s17, 2
    %p150 = por %p148, %p149
    %p152 = scmp.ne.s32.totalorder %s135, %s151
    %p153 = scmp.eq.s32.totalorder %s17, 0
    %p154 = por %p152, %p153
    %p155 = scmp.le.s32.totalorder 1, %s11
    %p156 = scmp.lt.s32.totalorder %s11, 4
    %p157 = pnand %p155, %p156
    %p158 = pneg %p157
    // Predicated region
    $region9: #{mlp_forward.1} parent=5 // pred_check
      _
    $region10: #{mlp_forward.1} parent=5 // pred_check_branch
      %160 = sbr.rel (%p157) target = $region12
    $region11: #{mlp_forward.1} parent=5 // pred_region
      %s161 = ssub.s32 %s11, 1
      // Predicated region
      $region13: #{mlp_forward.1} parent=11 // pred_check
        %p162 = pneg %p58
      $region14: #{mlp_forward.1} parent=11 // pred_check_branch
        %164 = sbr.rel (%p162) target = $region16
      $region15: #{mlp_forward.1} parent=11 // pred_region
        _
      $region16: #{mlp_forward.1} parent=11 // pred_fallthru
        _
      // Predicated region
      $region17: #{mlp_forward.1} parent=11 // pred_check
        %p165 = pneg %p79
      $region18: #{mlp_forward.1} parent=11 // pred_check_branch
        %167 = sbr.rel (%p165) target = $region20
      $region19: #{mlp_forward.1} parent=11 // pred_region
        _
      $region20: #{mlp_forward.1} parent=11 // pred_fallthru
        _
      // Predicated region
      $region21: #{mlp_forward.1} parent=11 // pred_check
        %p168 = pneg %p100
      $region22: #{mlp_forward.1} parent=11 // pred_check_branch
        %170 = sbr.rel (%p168) target = $region24
      $region23: #{mlp_forward.1} parent=11 // pred_region
        _
      $region24: #{mlp_forward.1} parent=11 // pred_fallthru
        _
      // Predicated region
      $region25: #{mlp_forward.1} parent=11 // pred_check
        %p171 = pneg %p121
      $region26: #{mlp_forward.1} parent=11 // pred_check_branch
        %173 = sbr.rel (%p171) target = $region28
      $region27: #{mlp_forward.1} parent=11 // pred_region
        _
      $region28: #{mlp_forward.1} parent=11 // pred_fallthru
        _
    $region12: #{mlp_forward.1} parent=5 // pred_fallthru
      _
    %p174 = scmp.lt.s32.totalorder %s11, 3
    // Predicated region
    $region29: #{mlp_forward.1} parent=5 // pred_check
      %p175 = pneg %p174
    $region30: #{mlp_forward.1} parent=5 // pred_check_branch
      %177 = sbr.rel (%p175) target = $region32
    $region31: #{mlp_forward.1} parent=5 // pred_region
      // Predicated region
      $region33: #{mlp_forward.1} parent=31 // pred_check
        %p178 = pneg %p31
      $region34: #{mlp_forward.1} parent=31 // pred_check_branch
        %180 = sbr.rel (%p178) target = $region36
      $region35: #{mlp_forward.1} parent=31 // pred_region
        %s181 = smul.u32 2, %s11
        %p182 = scmp.lt.s32.totalorder %s181, 5
        %s183 = scalar_select %p182, %s181, 5
        %s184 = smul.addr %s183, 8
        %s185 = scalar_lea.vmem %s0, %s184
        %s186 = smul.u32 2, %s11
      $region36: #{mlp_forward.1} parent=31 // pred_fallthru
        _
    $region32: #{mlp_forward.1} parent=5 // pred_fallthru
      _
    %p187 = scmp.le.s32.totalorder 1, %s11
    %p188 = scmp.lt.s32.totalorder %s11, 4
    %p189 = pnand %p187, %p188
    %p190 = pneg %p189
    // Predicated region
    $region37: #{mlp_forward.1} parent=5 // pred_check
      _
    $region38: #{mlp_forward.1} parent=5 // pred_check_branch
      %192 = sbr.rel (%p189) target = $region40
    $region39: #{mlp_forward.1} parent=5 // pred_region
      %s193 = ssub.s32 %s11, 1
      %s194 = smul.u32 2, %s16
      %p195 = scmp.lt.s32.totalorder %s194, 5
      %s196 = scalar_select %p195, %s194, 5
      %s197 = smul.addr %s196, 8
      %s198 = scalar_lea.vmem %s0, %s197
      %p199 = pneg %p37
      %p200 = pneg %p34
      %p201 = pneg %p58
      %p202 = pneg %p55
      %p203 = pneg %p79
      %p204 = pneg %p76
      %p205 = pneg %p100
      %p206 = pneg %p97
      %p207 = pneg %p121
      %p208 = pneg %p118
      %p209 = pneg %p147
      %p210 = pneg %p144
      %s211 = smul.u32 2, %s16
      %p212 = scmp.lt.s32.totalorder %s211, 5
      %s213 = scalar_select %p212, %s211, 5
      %s214 = smul.addr %s213, 8
      %s215 = scalar_lea.vmem %s5, %s214
      %s216 = smul.u32 2, %s16
      %p217 = scmp.lt.s32.totalorder %s216, 5
      %s218 = scalar_select %p217, %s216, 5
      %s219 = smul.addr %s218, 8
      %s220 = scalar_lea.vmem %s0, %s219
      %s221 = smul.u32 2, %s16
      %s222 = smul.u32 2, %s16
      %p223 = scmp.lt.s32.totalorder %s222, 5
      %s224 = scalar_select %p223, %s222, 5
      %s225 = smul.addr %s224, 8
      %s226 = scalar_lea.vmem %s5, %s225
      %s227 = smul.u32 2, %s16
      %v228 = vld [vmem:[%s220] sm:$0xff]
      %v229 = vld [vmem:[%s220 + $0x8] sm:$0xff]
      %v230 = vld [vmem:[%s1] sm:$0xff]
      %v231 = vld [vmem:[%s1 + $0x8] sm:$0xff]
      %v232 = vld [vmem:[%s1 + $0x10] sm:$0xff]
      %v233 = vld [vmem:[%s1 + $0x18] sm:$0xff]
      %v234 = vld [vmem:[%s1 + $0x20] sm:$0xff]
      %v235 = vld [vmem:[%s1 + $0x28] sm:$0xff]
      %v236 = vld [vmem:[%s1 + $0x30] sm:$0xff]
      %v237 = vld [vmem:[%s1 + $0x38] sm:$0xff]
      %v238 = vld [vmem:[%s1 + $0x40] sm:$0xff]
      %v239 = vld [vmem:[%s1 + $0x48] sm:$0xff]
      %v240 = vld [vmem:[%s1 + $0x50] sm:$0xff]
      %v241 = vld [vmem:[%s1 + $0x58] sm:$0xff]
      %v242 = vld [vmem:[%s1 + $0x60] sm:$0xff]
      %v243 = vld [vmem:[%s1 + $0x68] sm:$0xff]
      %v244 = vld [vmem:[%s1 + $0x70] sm:$0xff]
      %v245 = vld [vmem:[%s1 + $0x78] sm:$0xff]
      %v246 = vld [vmem:[%s2] sm:$0x1]
      %v248 = vlaneseq
      %v249 = vshrl.u32 %v248, 7
      %v250 = vsub.s32 0, %v249
      %v251 = vrot.slane %v246, %v250
      %253 = vmatprep.subr.mxu0 0.0
      %254 = vmatpush1.msra.mxu0 %v245
      %255 = vmatprep.subr.mxu0 0.0
      %256 = vmatpush1.msra.mxu0 %v244
      %257 = vmatprep.subr.mxu0 0.0
      %258 = vmatpush1.msra.mxu0 %v243
      %259 = vmatprep.subr.mxu0 0.0
      %260 = vmatpush1.msra.mxu0 %v242
      %261 = vmatprep.subr.mxu0 0.0
      %262 = vmatpush1.msra.mxu0 %v241
      %263 = vmatprep.subr.mxu0 0.0
      %264 = vmatpush1.msra.mxu0 %v240
      %265 = vmatprep.subr.mxu0 0.0
      %266 = vmatpush1.msra.mxu0 %v239
      %267 = vmatprep.subr.mxu0 0.0
      %268 = vmatpush1.msra.mxu0 %v238
      %269 = vmatprep.subr.mxu0 0.0
      %270 = vmatpush1.msra.mxu0 %v237
      %271 = vmatprep.subr.mxu0 0.0
      %272 = vmatpush1.msra.mxu0 %v236
      %273 = vmatprep.subr.mxu0 0.0
      %274 = vmatpush1.msra.mxu0 %v235
      %275 = vmatprep.subr.mxu0 0.0
      %276 = vmatpush1.msra.mxu0 %v234
      %277 = vmatprep.subr.mxu0 0.0
      %278 = vmatpush1.msra.mxu0 %v233
      %279 = vmatprep.subr.mxu0 0.0
      %280 = vmatpush1.msra.mxu0 %v232
      %281 = vmatprep.subr.mxu0 0.0
      %282 = vmatpush1.msra.mxu0 %v231
      %283 = vmatprep.subr.mxu0 0.0
      %284 = vmatpush1.msra.mxu0 %v230
      %285 = vmatprep.subr.mxu0 0.0
      %286 = vmatpush2.msra.mxu0 0.0
      %287 = vmatprep.subr.mxu0 0.0
      %288 = vmatpush2.msra.mxu0 0.0
      %289 = vmatprep.subr.mxu0 0.0
      %290 = vmatpush2.msra.mxu0 0.0
      %291 = vmatprep.subr.mxu0 0.0
      %292 = vmatpush2.msra.mxu0 0.0
      %293 = vmatprep.subr.mxu0 0.0
      %294 = vmatpush2.msra.mxu0 0.0
      %295 = vmatprep.subr.mxu0 0.0
      %296 = vmatpush2.msra.mxu0 0.0
      %297 = vmatprep.subr.mxu0 0.0
      %298 = vmatpush2.msra.mxu0 0.0
      %299 = vmatprep.subr.mxu0 0.0
      %300 = vmatpush2.msra.mxu0 0.0
      %301 = vmatprep.subr.mxu0 0.0
      %302 = vmatpush2.msra.mxu0 0.0
      %303 = vmatprep.subr.mxu0 0.0
      %304 = vmatpush2.msra.mxu0 0.0
      %305 = vmatprep.subr.mxu0 0.0
      %306 = vmatpush2.msra.mxu0 0.0
      %307 = vmatprep.subr.mxu0 0.0
      %308 = vmatpush2.msra.mxu0 0.0
      %309 = vmatprep.subr.mxu0 0.0
      %310 = vmatpush2.msra.mxu0 0.0
      %311 = vmatprep.subr.mxu0 0.0
      %312 = vmatpush2.msra.mxu0 0.0
      %313 = vmatprep.subr.mxu0 0.0
      %314 = vmatpush2.msra.mxu0 0.0
      %315 = vmatprep.subr.mxu0 0.0
      %316 = vmatpush2.msra.mxu0 0.0
      %317 = vmatprep.mubr.f32.mxu0 0.0
      %318 = vmatmul.mubr.f32.gmra.mxu0 %v228
      %v319 = vpop.f32.mrf.mxu0
      %v320 = vadd.f32 %v251, %v319
      %v321 = vpop.f32.mrf.mxu0
      %322 = vmatprep.mubr.f32.mxu0 0.0
      %323 = vmatmul.mubr.f32.gmra.mxu0 %v229
      %v324 = vpop.f32.mrf.mxu0
      %v325 = vadd.f32 %v251, %v324
      %v326 = vpop.f32.mrf.mxu0
      %327 = vdwg.mxu0
      %v328 = vmax.f32 %v320, 0.0
      %v329 = vmax.f32 %v325, 0.0
      %v330 = vld [vmem:[%s3] sm:$0xff]
      %v331 = vld [vmem:[%s3 + $0x8] sm:$0xff]
      %v332 = vld [vmem:[%s3 + $0x10] sm:$0xff]
      %v333 = vld [vmem:[%s3 + $0x18] sm:$0xff]
      %v334 = vld [vmem:[%s3 + $0x20] sm:$0xff]
      %v335 = vld [vmem:[%s3 + $0x28] sm:$0xff]
      %v336 = vld [vmem:[%s3 + $0x30] sm:$0xff]
      %v337 = vld [vmem:[%s3 + $0x38] sm:$0xff]
      %v338 = vld [vmem:[%s3 + $0x40] sm:$0xff]
      %v339 = vld [vmem:[%s3 + $0x48] sm:$0xff]
      %v340 = vld [vmem:[%s3 + $0x50] sm:$0xff]
      %v341 = vld [vmem:[%s3 + $0x58] sm:$0xff]
      %v342 = vld [vmem:[%s3 + $0x60] sm:$0xff]
      %v343 = vld [vmem:[%s3 + $0x68] sm:$0xff]
      %v344 = vld [vmem:[%s3 + $0x70] sm:$0xff]
      %v345 = vld [vmem:[%s3 + $0x78] sm:$0xff]
      %v346 = vld [vmem:[%s4] sm:$0x1]
      %v348 = vlaneseq
      %v349 = vshrl.u32 %v348, 7
      %v350 = vsub.s32 0, %v349
      %v351 = vrot.slane %v346, %v350
      %353 = vmatprep.subr.mxu0 0.0
      %354 = vmatpush1.msra.mxu0 %v345
      %355 = vmatprep.subr.mxu0 0.0
      %356 = vmatpush1.msra.mxu0 %v344
      %357 = vmatprep.subr.mxu0 0.0
      %358 = vmatpush1.msra.mxu0 %v343
      %359 = vmatprep.subr.mxu0 0.0
      %360 = vmatpush1.msra.mxu0 %v342
      %361 = vmatprep.subr.mxu0 0.0
      %362 = vmatpush1.msra.mxu0 %v341
      %363 = vmatprep.subr.mxu0 0.0
      %364 = vmatpush1.msra.mxu0 %v340
      %365 = vmatprep.subr.mxu0 0.0
      %366 = vmatpush1.msra.mxu0 %v339
      %367 = vmatprep.subr.mxu0 0.0
      %368 = vmatpush1.msra.mxu0 %v338
      %369 = vmatprep.subr.mxu0 0.0
      %370 = vmatpush1.msra.mxu0 %v337
      %371 = vmatprep.subr.mxu0 0.0
      %372 = vmatpush1.msra.mxu0 %v336
      %373 = vmatprep.subr.mxu0 0.0
      %374 = vmatpush1.msra.mxu0 %v335
      %375 = vmatprep.subr.mxu0 0.0
      %376 = vmatpush1.msra.mxu0 %v334
      %377 = vmatprep.subr.mxu0 0.0
      %378 = vmatpush1.msra.mxu0 %v333
      %379 = vmatprep.subr.mxu0 0.0
      %380 = vmatpush1.msra.mxu0 %v332
      %381 = vmatprep.subr.mxu0 0.0
      %382 = vmatpush1.msra.mxu0 %v331
      %383 = vmatprep.subr.mxu0 0.0
      %384 = vmatpush1.msra.mxu0 %v330
      %385 = vmatprep.subr.mxu0 0.0
      %386 = vmatpush2.msra.mxu0 0.0
      %387 = vmatprep.subr.mxu0 0.0
      %388 = vmatpush2.msra.mxu0 0.0
      %389 = vmatprep.subr.mxu0 0.0
      %390 = vmatpush2.msra.mxu0 0.0
      %391 = vmatprep.subr.mxu0 0.0
      %392 = vmatpush2.msra.mxu0 0.0
      %393 = vmatprep.subr.mxu0 0.0
      %394 = vmatpush2.msra.mxu0 0.0
      %395 = vmatprep.subr.mxu0 0.0
      %396 = vmatpush2.msra.mxu0 0.0
      %397 = vmatprep.subr.mxu0 0.0
      %398 = vmatpush2.msra.mxu0 0.0
      %399 = vmatprep.subr.mxu0 0.0
      %400 = vmatpush2.msra.mxu0 0.0
      %401 = vmatprep.subr.mxu0 0.0
      %402 = vmatpush2.msra.mxu0 0.0
      %403 = vmatprep.subr.mxu0 0.0
      %404 = vmatpush2.msra.mxu0 0.0
      %405 = vmatprep.subr.mxu0 0.0
      %406 = vmatpush2.msra.mxu0 0.0
      %407 = vmatprep.subr.mxu0 0.0
      %408 = vmatpush2.msra.mxu0 0.0
      %409 = vmatprep.subr.mxu0 0.0
      %410 = vmatpush2.msra.mxu0 0.0
      %411 = vmatprep.subr.mxu0 0.0
      %412 = vmatpush2.msra.mxu0 0.0
      %413 = vmatprep.subr.mxu0 0.0
      %414 = vmatpush2.msra.mxu0 0.0
      %415 = vmatprep.subr.mxu0 0.0
      %416 = vmatpush2.msra.mxu0 0.0
      %417 = vmatprep.mubr.f32.mxu0 0.0
      %418 = vmatmul.mubr.f32.gmra.mxu0 %v328
      %v419 = vpop.f32.mrf.mxu0
      %v420 = vadd.f32 %v351, %v419
      %v421 = vpop.f32.mrf.mxu0
      %422 = vmatprep.mubr.f32.mxu0 0.0
      %423 = vmatmul.mubr.f32.gmra.mxu0 %v329
      %v424 = vpop.f32.mrf.mxu0
      %v425 = vadd.f32 %v351, %v424
      %v426 = vpop.f32.mrf.mxu0
      %427 = vdwg.mxu0
      %v428 = vlaneseq
      %v429 = vand.u32 %v428, 127
      %vm430 = vcmp.lt.s32.totalorder %v429, 16
      %v431 = vsel %vm430, %v420, -1e+30
      %v432 = vsel %vm430, %v425, -1e+30
      %433 = vmax.xlane.f32.xlu0 %v431
      %v434 = vpop.xlane.xlu0 %433
      %435 = vmax.xlane.f32.xlu0 %v432
      %v436 = vpop.xlane.xlu0 %435
      %v437 = vsub.f32 %v431, %v434
      %v438 = vsub.f32 %v432, %v436
      %v439 = vmul.f32 %v437, 1.442695
      %v440 = vpow.pop %v439
      %v441 = vmul.f32 %v438, 1.442695
      %v442 = vpow.pop %v441
      %v443 = vsel %vm430, %v440, 0.0
      %v444 = vsel %vm430, %v442, 0.0
      %445 = vadd.xlane.f32.xlu0 %v443
      %v446 = vpop.xlane.xlu0 %445
      %447 = vadd.xlane.f32.xlu0 %v444
      %v448 = vpop.xlane.xlu0 %447
      %v449 = vrcp.pop %v446
      %v450 = vmul.f32 %v443, %v449
      %v451 = vrcp.pop %v448
      %v452 = vmul.f32 %v444, %v451
      %453 = vst [vmem:[%s226] sm:$0xff] %v450
      %454 = vst [vmem:[%s226 + $0x8] sm:$0xff] %v452
      %s455 = smul.u32 2, %s16
      %p456 = scmp.lt.s32.totalorder %s455, 5
      %s457 = scalar_select %p456, %s455, 5
      %s458 = smul.addr %s457, 8
      %s459 = scalar_lea.vmem %s5, %s458
      // Predicated region
      $region41: #{mlp_forward.1} parent=39 // pred_check
        %p460 = pneg %p144
      $region42: #{mlp_forward.1} parent=39 // pred_check_branch
        %462 = sbr.rel (%p460) target = $region44
      $region43: #{mlp_forward.1} parent=39 // pred_region
        %s463 = smul.u32 2, %s16
      $region44: #{mlp_forward.1} parent=39 // pred_fallthru
        _
    $region40: #{mlp_forward.1} parent=5 // pred_fallthru
      _
    %p464 = scmp.le.s32.totalorder 2, %s11
    // Predicated region
    $region45: #{mlp_forward.1} parent=5 // pred_check
      %p465 = pneg %p464
    $region46: #{mlp_forward.1} parent=5 // pred_check_branch
      %467 = sbr.rel (%p465) target = $region48
    $region47: #{mlp_forward.1} parent=5 // pred_region
      %s468 = ssub.s32 %s11, 2
      // Predicated region
      $region49: #{mlp_forward.1} parent=47 // pred_check
        %p469 = pneg %p150
      $region50: #{mlp_forward.1} parent=47 // pred_check_branch
        %471 = sbr.rel (%p469) target = $region52
      $region51: #{mlp_forward.1} parent=47 // pred_region
        %s472 = smul.u32 2, %s17
        %p473 = scmp.lt.s32.totalorder %s472, 5
        %s474 = scalar_select %p473, %s472, 5
        %s475 = smul.addr %s474, 8
        %s476 = scalar_lea.vmem %s5, %s475
      $region52: #{mlp_forward.1} parent=47 // pred_fallthru
        _
    $region48: #{mlp_forward.1} parent=5 // pred_fallthru
      _
  $region6: #{mlp_forward.1} parent=0 // loop_footer
    %s15 = sadd.s32 1, %s11
  $region7: #{mlp_forward.1} parent=0 // loop_footer_branch
    %10 = sbr.rel target = $region3
  $region8: #{mlp_forward.1} parent=0 // loop_exit
    _

</llo_original>
